<compile_context>
chip_gen: v6e
topology: v6e:2x2x1
jax: 0.10.0
libtpu: 0.0.40
codegen_flags: <defaults>
</compile_context>

<pallas_src>
import jax
import jax.numpy as jnp
from jax.experimental import pallas as pl
from jax.experimental.pallas import tpu as pltpu


def _relu_half_kernel(x_ref, o_ref):
    # x_ref, o_ref: (bb, bf) VMEM tiles. The halves grid axis stores the same
    # relu'd input tile into the left / right half of the output feature axis,
    # which is exactly cat((x, x), dim=1) followed by flatten.
    x = x_ref[...]
    o_ref[...] = jnp.maximum(x, jnp.zeros((), dtype=x.dtype))


def _pick_tile(extent, cap, quantum):
    """Largest multiple of `quantum` that divides `extent` and is <= cap, else None."""
    top = min(cap, extent)
    top -= top % quantum
    for cand in range(top, 0, -quantum):
        if extent % cand == 0:
            return cand
    return None


def _select_tiling():
    """Generation-aware defaults (batch tile, feature tile, vmem limit)."""
    # Conservative default, safe on v7x (64 MiB physical VMEM):
    # 512 x 2048 f32 blocks ~= 4 MiB -> ~16 MiB resident double-buffered.
    block_b, block_f, vmem_limit = 512, 2048, 32 << 20
    try:
        info = pltpu.get_tpu_info()
        if getattr(info, "vmem_capacity_bytes", 0) >= (96 << 20):
            # v5e / v6e: 128 MiB physical VMEM -> ~8 MiB blocks are comfortable.
            block_f, vmem_limit = 4096, 64 << 20
    except Exception:
        pass  # stick with the conservative (v7x-safe) defaults
    return block_b, block_f, vmem_limit


def _cat_relu_pallas(x_flat, bb, bf, vmem_limit):
    """x_flat: (B, F) -> (B, 2*F): relu, duplicated along the feature axis.

    Requires bb | B and bf | F (no padding, no extra HBM passes)."""
    B, F = x_flat.shape
    nb, nf = B // bb, F // bf
    grid = (nb, nf, 2)  # halves axis writes disjoint output blocks

    return pl.pallas_call(
        _relu_half_kernel,
        out_shape=jax.ShapeDtypeStruct((B, 2 * F), x_flat.dtype),
        grid_spec=pltpu.PrefetchScalarGridSpec(
            num_scalar_prefetch=0,
            grid=grid,
            in_specs=[pl.BlockSpec((bb, bf), lambda i, j, h: (i, j))],
            out_specs=pl.BlockSpec((bb, bf), lambda i, j, h: (i, h * nf + j)),
        ),
        compiler_params=pltpu.CompilerParams(
            # Every grid point writes a distinct output block -> fully parallel;
            # lets v7x shard the (tiny) halves axis across its 2 TensorCores.
            dimension_semantics=("parallel", "parallel", "parallel"),
            vmem_limit_bytes=vmem_limit,
        ),
    )(x_flat)


def model_forward(x, *, min_pallas_elems=100_000, block_b=None, block_f=None):
    """x: (B, C, D) -> relu(cat((x, x), dim=1).reshape(B, -1)); 1-D if B == 1."""
    B = x.shape[0]
    x_flat = x.reshape(B, -1)  # glue: flatten minor dims in plain JAX
    F = x_flat.shape[1]

    bb_cap, bf_cap, vmem_limit = _select_tiling()
    if block_b is not None:
        bb_cap = block_b
    if block_f is not None:
        bf_cap = block_f

    # Tile selection WITHOUT padding: full-extent batch block when it fits,
    # otherwise a multiple-of-8 divisor; feature tile a multiple of 128
    # dividing F. If either is impossible, use the fused XLA path instead of
    # paying pad + unpad HBM passes.
    bb = B if B <= bb_cap else _pick_tile(B, bb_cap, 8)
    bf = _pick_tile(F, bf_cap, 128)

    if (B * F >= min_pallas_elems) and bb is not None and bf is not None:
        out = _cat_relu_pallas(x_flat, bb, bf, vmem_limit)
    else:
        # Trivially fusable op; XLA is at roofline for small / unaligned shapes.
        out = jnp.maximum(jnp.concatenate([x_flat, x_flat], axis=-1), 0)

    # Mirror the PyTorch branch: view(-1) when batch == 1, else view(B, -1).
    return out.reshape(-1) if B == 1 else out


def _reference(x):
    B = x.shape[0]
    out = jnp.maximum(jnp.concatenate([x, x], axis=1).reshape(B, -1), 0)
    return out.reshape(-1) if B == 1 else out


if __name__ == "__main__":
    key = jax.random.PRNGKey(0)
    k0, k1, k2, k3 = jax.random.split(key, 4)

    # 1) Pallas path (forced): lane-aligned feature axis, single tile.
    x = jax.random.normal(k0, (8, 16, 128), dtype=jnp.float32)       # F = 2048
    out = jax.block_until_ready(model_forward(x, min_pallas_elems=0))
    ref = _reference(x)
    assert out.shape == ref.shape == (8, 4096), (out.shape, ref.shape)
    assert jnp.array_equal(out, ref), "mismatch vs reference (pallas path)"

    # 2) Pallas path (forced): multiple feature blocks on v7x tiling.
    x2 = jax.random.normal(k1, (16, 32, 128), dtype=jnp.float32)     # F = 4096
    out2 = jax.block_until_ready(model_forward(x2, min_pallas_elems=0))
    ref2 = _reference(x2)
    assert out2.shape == (16, 8192), out2.shape
    assert jnp.array_equal(out2, ref2), "mismatch vs reference (pallas, multi-block)"

    # 3) Pallas path (forced), batch == 1 -> flat output view.
    x1 = jax.random.normal(k2, (1, 16, 128), dtype=jnp.float32)
    out1 = jax.block_until_ready(model_forward(x1, min_pallas_elems=0))
    ref1 = _reference(x1)
    assert out1.shape == (4096,), out1.shape
    assert jnp.array_equal(out1, ref1), "mismatch vs reference (pallas, B=1)"

    # 4) The literal toy shape from the PyTorch script: XLA fallback path.
    x_tiny = jax.random.normal(k3, (2, 3, 4), dtype=jnp.float32)
    out_tiny = jax.block_until_ready(model_forward(x_tiny))
    ref_tiny = _reference(x_tiny)
    assert out_tiny.shape == (2, 24), out_tiny.shape
    assert jnp.array_equal(out_tiny, ref_tiny), "mismatch vs reference (fallback path)"

    print("KERNEL_OK")
</pallas_src>

<mosaic_0001>
module attributes {stable_mosaic.version = 11 : i64} {
  func.func @_relu_half_kernel(%arg0: i32, %arg1: i32, %arg2: i32, %arg3: memref<8x2048xf32, #tpu.memory_space<vmem>>, %arg4: memref<8x2048xf32, #tpu.memory_space<vmem>>) attributes {dimension_semantics = [#tpu.dimension_semantics<parallel>, #tpu.dimension_semantics<parallel>, #tpu.dimension_semantics<parallel>], iteration_bounds = array<i64: 1, 1, 2>, scalar_prefetch = 0 : i64, scratch_operands = 0 : i64, tpu.core_type = #tpu.core_type<tc>, window_params = [{transform_indices = @transform_0, window_bounds = array<i64: 8, 2048>}, {transform_indices = @transform_1, window_bounds = array<i64: 8, 2048>}]} {
    %c0 = arith.constant 0 : index
    %c0_0 = arith.constant 0 : index
    %0 = vector.load %arg3[%c0, %c0_0] : memref<8x2048xf32, #tpu.memory_space<vmem>>, vector<8x2048xf32>
    %cst = arith.constant 0.000000e+00 : f32
    %1 = vector.broadcast %cst : f32 to vector<8x2048xf32>
    %2 = arith.maximumf %0, %1 : vector<8x2048xf32>
    %c0_1 = arith.constant 0 : index
    %c0_2 = arith.constant 0 : index
    %3 = vector.load %arg4[%c0_1, %c0_2] : memref<8x2048xf32, #tpu.memory_space<vmem>>, vector<8x2048xf32>
    tpu.vector_store %arg4[%c0_1, %c0_2], %2 {strides = array<i32>} : memref<8x2048xf32, #tpu.memory_space<vmem>>, vector<8x2048xf32>,
    return
  }
  func.func @transform_0(%arg0: i32, %arg1: i32, %arg2: i32) -> (i32, i32) {
    %c0_i32 = arith.constant 0 : i32
    return %arg0, %arg1 : i32, i32
  }
  func.func @transform_1(%arg0: i32, %arg1: i32, %arg2: i32) -> (i32, i32) {
    %c1_i32 = arith.constant 1 : i32
    %0 = arith.muli %arg2, %c1_i32 : i32
    %1 = arith.addi %0, %arg1 : i32
    %c0_i32 = arith.constant 0 : i32
    return %arg0, %1 : i32, i32
  }
}

</mosaic_0001>

<llo_original>
// kernel: tpu_custom_call.1
$region0: #{tpu_custom_call.1}
  #allocation0 [shape = 'u32[]', space=smem, size = 0x4, offset = 0x4, fixed_abs, tag = 'smem constant byte address 0x4 - core index']
  #allocation1 [shape = 'u32[144,128]{1,0:T(1,128)}', space=vmem, size = 0x12000, scoped, tag = 'internal scratch']
  %s0 = inlined_call_operand.hbm [shape: f32[8,2048], index: 0, kind: input, shape index: {}]
  %s1 = inlined_call_operand.hbm [shape: f32[8,4096], index: 1, kind: output, shape index: {}]
  %s2 = sld [smem:[#allocation0]]
  $region41: #{tpu_custom_call.1} parent=0
    _
  %s4 = ssub.s32 1, %s2
  %s5 = scalar_select 0, %s4, %s2
  $region1: #{tpu_custom_call.1} parent=0
    #allocation2 [shape = 'u8[65536]{0}', space=vmem, size = 0x10000, scoped, tag = 'input window, operand 0, single buffered']
    #allocation3 [shape = 's32[2]{0}', space=sflag, size = 0x8, scoped, tag = 'scoped memory for tpu_custom_call.1']
    #allocation4 [shape = 's32[2]{0}', space=sflag, size = 0x8, scoped, tag = 'scoped memory for tpu_custom_call.1']
    #allocation5 [shape = 'u8[131072]{0}', space=vmem, size = 0x20000, scoped, tag = 'output window, operand 0']
    %6 = vsyncpa [#allocation3], 0
    %7 = vsyncpa [#allocation4], 0
    %s8 = scalar_lea.sflag [#allocation4], 1
    %9 = vsyncpa %s8, 0
    loop: start=0, step=1, limit=4
    $region2: #{tpu_custom_call.1} parent=1 // loop_pre_header
      _
    $region3: #{tpu_custom_call.1} parent=1 // loop_header
      %s11 = sphi 0, %s15
      %p12 = scmp.ge.s32.totalorder %s11, 4
      %s18 = sphi 0, %s37
      %s19 = sphi 0, %s33
      %s20 = sphi 0, %s29
      %s21 = sphi 0, %s18
      %s22 = sphi 0, %s19
      %s23 = sphi 0, %s20
      %s24 = sphi 0, %s21
      %s25 = sphi 0, %s22
      %s26 = sphi 0, %s23
      %s42 = sphi 0, %s44
      %s45 = sphi 0, %s42
      %s46 = sphi 0, %s45
      %s62 = sphi 0, %s46
      %s72 = sphi 0, %s74
      %s75 = sphi 0, %s72
      %s76 = sphi 0, %s75
      %s92 = sphi 0, %s76
    $region4: #{tpu_custom_call.1} parent=1 // loop_header_branch
      %14 = sbr.rel (%p12) target = $region8
    $region5: #{tpu_custom_call.1} parent=1 // loop_body
      %s16 = ssub.s32 %s11, 1
      %s17 = ssub.s32 %s11, 2
      %s27 = sadd.s32 1, %s20
      %p28 = scmp.ge.s32.totalorder %s27, 2
      %s29 = scalar_select %p28, 0, %s27
      %s30 = sadd.s32 1, %s19
      %s31 = scalar_select %p28, %s30, %s19
      %p32 = scmp.ge.s32.totalorder %s31, 1
      %s33 = scalar_select %p32, 0, %s31
      %s34 = sadd.s32 1, %s18
      %s35 = scalar_select %p32, %s34, %s18
      %p36 = scmp.ge.s32.totalorder %s35, 1
      %s37 = scalar_select %p36, 0, %s35
      %s38 = ssub.s32 %s18, %s37
      %s39 = ssub.s32 %s19, %s33
      %s40 = sor.u32 %s38, %s39
      %p41 = scmp.eq.s32.totalorder %s40, 0
      %s43 = sadd.s32 %s42, 1
      %s44 = scalar_select %p41, %s42, %s43
      %p47 = pneg %p41
      %p48 = scmp.eq.s32.totalorder %s11, 1
      %p49 = por %p47, %p48
      %p50 = scmp.ne.s32.totalorder %s42, %s45
      %p51 = scmp.eq.s32.totalorder %s11, 0
      %p52 = por %p50, %p51
      %p53 = scmp.ne.s32.totalorder %s42, %s45
      %p54 = scmp.eq.s32.totalorder %s16, 1
      %p55 = por %p53, %p54
      %p56 = scmp.ne.s32.totalorder %s45, %s46
      %p57 = scmp.eq.s32.totalorder %s16, 0
      %p58 = por %p56, %p57
      %p59 = scmp.ne.s32.totalorder %s45, %s46
      %p60 = scmp.eq.s32.totalorder %s17, 1
      %p61 = por %p59, %p60
      %p63 = scmp.ne.s32.totalorder %s46, %s62
      %p64 = scmp.eq.s32.totalorder %s17, 0
      %p65 = por %p63, %p64
      %s66 = sadd.s32 %s20, %s19
      %s67 = sadd.s32 %s29, %s33
      %s68 = ssub.s32 %s18, %s37
      %s69 = ssub.s32 %s66, %s67
      %s70 = sor.u32 %s68, %s69
      %p71 = scmp.eq.s32.totalorder %s70, 0
      %s73 = sadd.s32 %s72, 1
      %s74 = scalar_select %p71, %s72, %s73
      %p77 = pneg %p71
      %p78 = scmp.eq.s32.totalorder %s11, 1
      %p79 = por %p77, %p78
      %p80 = scmp.ne.s32.totalorder %s72, %s75
      %p81 = scmp.eq.s32.totalorder %s11, 0
      %p82 = por %p80, %p81
      %p83 = scmp.ne.s32.totalorder %s72, %s75
      %p84 = scmp.eq.s32.totalorder %s16, 1
      %p85 = por %p83, %p84
      %p86 = scmp.ne.s32.totalorder %s75, %s76
      %p87 = scmp.eq.s32.totalorder %s16, 0
      %p88 = por %p86, %p87
      %p89 = scmp.ne.s32.totalorder %s75, %s76
      %p90 = scmp.eq.s32.totalorder %s17, 1
      %p91 = por %p89, %p90
      %p93 = scmp.ne.s32.totalorder %s76, %s92
      %p94 = scmp.eq.s32.totalorder %s17, 0
      %p95 = por %p93, %p94
      %p96 = scmp.le.s32.totalorder 1, %s11
      %p97 = scmp.lt.s32.totalorder %s11, 3
      %p98 = pnand %p96, %p97
      %p99 = pneg %p98
      // Predicated region
      $region9: #{tpu_custom_call.1} parent=5 // pred_check
        _
      $region10: #{tpu_custom_call.1} parent=5 // pred_check_branch
        %101 = sbr.rel (%p98) target = $region12
      $region11: #{tpu_custom_call.1} parent=5 // pred_region
        %s102 = ssub.s32 %s11, 1
        // Predicated region
        $region13: #{tpu_custom_call.1} parent=11 // pred_check
          %p103 = pneg %p58
        $region14: #{tpu_custom_call.1} parent=11 // pred_check_branch
          %105 = sbr.rel (%p103) target = $region16
        $region15: #{tpu_custom_call.1} parent=11 // pred_region
          %s106 = smul.u32 16, %s22
          %s108 = ssub.s32 2048, 2048
          %109 = vsyncadd [#allocation3], %s108
          %s110 = smul.addr %s21, 16
          %s111 = sadd.s32 %s106, %s110
          %s112 = smul.addr %s111, 128
          %s113 = scalar_lea.hbm %s0, %s112
          %s115 = sshll.u32 [#allocation2], 4
          %s116 = int_to_ptr.vmem [resolvable:$true] %s115
          %118 = dma.hbm_to_vmem [thread:$0]  %s113, 2048, %s116, [#allocation3]
        $region16: #{tpu_custom_call.1} parent=11 // pred_fallthru
          _
      $region12: #{tpu_custom_call.1} parent=5 // pred_fallthru
        _
      %p119 = scmp.lt.s32.totalorder %s11, 2
      // Predicated region
      $region17: #{tpu_custom_call.1} parent=5 // pred_check
        %p120 = pneg %p119
      $region18: #{tpu_custom_call.1} parent=5 // pred_check_branch
        %122 = sbr.rel (%p120) target = $region20
      $region19: #{tpu_custom_call.1} parent=5 // pred_region
        _
      $region20: #{tpu_custom_call.1} parent=5 // pred_fallthru
        _
      %p123 = scmp.le.s32.totalorder 1, %s11
      %p124 = scmp.lt.s32.totalorder %s11, 3
      %p125 = pnand %p123, %p124
      %p126 = pneg %p125
      // Predicated region
      $region21: #{tpu_custom_call.1} parent=5 // pred_check
        _
      $region22: #{tpu_custom_call.1} parent=5 // pred_check_branch
        %128 = sbr.rel (%p125) target = $region24
      $region23: #{tpu_custom_call.1} parent=5 // pred_region
        %s129 = ssub.s32 %s11, 1
        // Predicated region
        $region25: #{tpu_custom_call.1} parent=23 // pred_check
          %p130 = pneg %p58
        $region26: #{tpu_custom_call.1} parent=23 // pred_check_branch
          %132 = sbr.rel (%p130) target = $region28
        $region27: #{tpu_custom_call.1} parent=23 // pred_region
          %133 = dma.done [#allocation3], 2048
        $region28: #{tpu_custom_call.1} parent=23 // pred_fallthru
          _
        %p134 = pneg %p58
        %p135 = pneg %p55
        %p136 = pneg %p88
        %p137 = pneg %p85
        %s138 = sand.u32 %s75, 1
        %s139 = scalar_lea.sflag [#allocation4], %s138
        %s140 = sand.u32 %s75, 1
        %s141 = smul.addr %s140, 128
        %s142 = scalar_lea.vmem [#allocation5], %s141
        %s143 = smul.u32 16, %s22
        %s144 = sadd.s32 %s23, %s22
        %s145 = smul.u32 16, %s144
        %v146 = vld [vmem:[#allocation2] sm:$0xff]
        %v147 = vld [vmem:[#allocation2 + $0x8] sm:$0xff]
        %v148 = vld [vmem:[#allocation2 + $0x10] sm:$0xff]
        %v149 = vld [vmem:[#allocation2 + $0x18] sm:$0xff]
        %v150 = vld [vmem:[#allocation2 + $0x20] sm:$0xff]
        %v151 = vld [vmem:[#allocation2 + $0x28] sm:$0xff]
        %v152 = vld [vmem:[#allocation2 + $0x30] sm:$0xff]
        %v153 = vld [vmem:[#allocation2 + $0x38] sm:$0xff]
        %v154 = vld [vmem:[#allocation2 + $0x40] sm:$0xff]
        %v155 = vld [vmem:[#allocation2 + $0x48] sm:$0xff]
        %v156 = vld [vmem:[#allocation2 + $0x50] sm:$0xff]
        %v157 = vld [vmem:[#allocation2 + $0x58] sm:$0xff]
        %v158 = vld [vmem:[#allocation2 + $0x60] sm:$0xff]
        %v159 = vld [vmem:[#allocation2 + $0x68] sm:$0xff]
        %v160 = vld [vmem:[#allocation2 + $0x70] sm:$0xff]
        %v161 = vld [vmem:[#allocation2 + $0x78] sm:$0xff]
        %v162 = vmax.f32 %v146, 0.0
        %v163 = vmax.f32 %v147, 0.0
        %v164 = vmax.f32 %v148, 0.0
        %v165 = vmax.f32 %v149, 0.0
        %v166 = vmax.f32 %v150, 0.0
        %v167 = vmax.f32 %v151, 0.0
        %v168 = vmax.f32 %v152, 0.0
        %v169 = vmax.f32 %v153, 0.0
        %v170 = vmax.f32 %v154, 0.0
        %v171 = vmax.f32 %v155, 0.0
        %v172 = vmax.f32 %v156, 0.0
        %v173 = vmax.f32 %v157, 0.0
        %v174 = vmax.f32 %v158, 0.0
        %v175 = vmax.f32 %v159, 0.0
        %v176 = vmax.f32 %v160, 0.0
        %v177 = vmax.f32 %v161, 0.0
        %178 = vst [vmem:[%s142] sm:$0xff] %v162
        %179 = vst [vmem:[%s142 + $0x8] sm:$0xff] %v163
        %180 = vst [vmem:[%s142 + $0x10] sm:$0xff] %v164
        %181 = vst [vmem:[%s142 + $0x18] sm:$0xff] %v165
        %182 = vst [vmem:[%s142 + $0x20] sm:$0xff] %v166
        %183 = vst [vmem:[%s142 + $0x28] sm:$0xff] %v167
        %184 = vst [vmem:[%s142 + $0x30] sm:$0xff] %v168
        %185 = vst [vmem:[%s142 + $0x38] sm:$0xff] %v169
        %186 = vst [vmem:[%s142 + $0x40] sm:$0xff] %v170
        %187 = vst [vmem:[%s142 + $0x48] sm:$0xff] %v171
        %188 = vst [vmem:[%s142 + $0x50] sm:$0xff] %v172
        %189 = vst [vmem:[%s142 + $0x58] sm:$0xff] %v173
        %190 = vst [vmem:[%s142 + $0x60] sm:$0xff] %v174
        %191 = vst [vmem:[%s142 + $0x68] sm:$0xff] %v175
        %192 = vst [vmem:[%s142 + $0x70] sm:$0xff] %v176
        %193 = vst [vmem:[%s142 + $0x78] sm:$0xff] %v177
        %s194 = sand.u32 %s75, 1
        %s195 = scalar_lea.sflag [#allocation4], %s194
        %s196 = sand.u32 %s75, 1
        %s197 = smul.addr %s196, 128
        %s198 = scalar_lea.vmem [#allocation5], %s197
        // Predicated region
        $region29: #{tpu_custom_call.1} parent=23 // pred_check
          %p199 = pneg %p85
        $region30: #{tpu_custom_call.1} parent=23 // pred_check_branch
          %201 = sbr.rel (%p199) target = $region32
        $region31: #{tpu_custom_call.1} parent=23 // pred_region
          %s202 = sadd.s32 %s23, %s22
          %s203 = smul.u32 16, %s202
          %s205 = ssub.s32 2048, 2048
          %206 = vsyncadd %s195, %s205
          %s207 = smul.addr %s21, 32
          %s208 = sadd.s32 %s203, %s207
          %s209 = smul.addr %s208, 128
          %s210 = scalar_lea.hbm %s1, %s209
          %s212 = sshll.u32 %s198, 4
          %s213 = int_to_ptr.vmem [resolvable:$true] %s212
          %215 = dma.vmem_to_hbm [thread:$0]  %s213, 2048, %s210, %s195
        $region32: #{tpu_custom_call.1} parent=23 // pred_fallthru
          _
      $region24: #{tpu_custom_call.1} parent=5 // pred_fallthru
        _
      %p216 = scmp.le.s32.totalorder 2, %s11
      // Predicated region
      $region33: #{tpu_custom_call.1} parent=5 // pred_check
        %p217 = pneg %p216
      $region34: #{tpu_custom_call.1} parent=5 // pred_check_branch
        %219 = sbr.rel (%p217) target = $region36
      $region35: #{tpu_custom_call.1} parent=5 // pred_region
        %s220 = ssub.s32 %s11, 2
        // Predicated region
        $region37: #{tpu_custom_call.1} parent=35 // pred_check
          %p221 = pneg %p91
        $region38: #{tpu_custom_call.1} parent=35 // pred_check_branch
          %223 = sbr.rel (%p221) target = $region40
        $region39: #{tpu_custom_call.1} parent=35 // pred_region
          %s224 = sand.u32 %s76, 1
          %s225 = scalar_lea.sflag [#allocation4], %s224
          %s226 = sand.u32 %s76, 1
          %s227 = smul.addr %s226, 128
          %s228 = scalar_lea.vmem [#allocation5], %s227
          %229 = dma.done %s225, 2048
        $region40: #{tpu_custom_call.1} parent=35 // pred_fallthru
          _
      $region36: #{tpu_custom_call.1} parent=5 // pred_fallthru
        _
    $region6: #{tpu_custom_call.1} parent=1 // loop_footer
      %s15 = sadd.s32 1, %s11
    $region7: #{tpu_custom_call.1} parent=1 // loop_footer_branch
      %10 = sbr.rel target = $region3
    $region8: #{tpu_custom_call.1} parent=1 // loop_exit
      _
    %230 = vsyncpa [#allocation3], 1
    %s231 = scalar_lea.sflag [#allocation3], 1
    %232 = vsyncpa %s231, 1
    %233 = vsyncpa [#allocation4], 1
    %s234 = scalar_lea.sflag [#allocation4], 1
    %235 = vsyncpa %s234, 1

</llo_original>
